<compile_context>
chip_gen: v7x
topology: tpu7x:2x2x1
jax: 0.10.0
libtpu: 0.0.40
codegen_flags: <defaults>
</compile_context>

<pallas_src>
import jax
import jax.numpy as jnp
from jax import lax
from jax.experimental import pallas as pl
from jax.experimental.pallas import tpu as pltpu

# ---------------- model dims (small, synthetic) ----------------
B_IMG = 2          # image batch
B_TXT = 2          # text batch
C_IN = 3           # RGB
H_IN = W_IN = 16   # small input spatial, upsampled to 224x224 like the module
H_OUT = W_OUT = 224
PATCH = 32
NP_Y = H_OUT // PATCH
NP_X = W_OUT // PATCH
NPATCH = NP_Y * NP_X                               # 49
K_IMG = C_IN * H_IN * W_IN                         # 768  (folded contraction dim)
SEQ = 8            # text context length (small)
VOCAB = 64
D_HID = 64         # encoder width
D_EMB = 64         # joint embedding dim
LN_EPS = 1e-5
L2_EPS = 1e-12


# ---------------- bilinear interpolation matrix (align_corners=True) ---------
def _interp_matrix(n_in, n_out):
    pos = jnp.arange(n_out, dtype=jnp.float32) * (n_in - 1) / (n_out - 1)
    lo = jnp.clip(jnp.floor(pos).astype(jnp.int32), 0, n_in - 2)
    frac = pos - lo.astype(jnp.float32)
    w = jnp.zeros((n_out, n_in), jnp.float32)
    rows = jnp.arange(n_out)
    w = w.at[rows, lo].add(1.0 - frac)
    w = w.at[rows, lo + 1].add(frac)
    return w


# ---------------- one-time weight fold -----------------------------------
# Folds upsample (bilinear, align_corners=True) + patchify + patch-embed +
# per-patch mean-pool into a single (K_IMG, D_HID) matrix.  All folds in f32,
# cast to bf16 last (per correctness review).
def precompute_folded(params):
    wy = _interp_matrix(H_IN, H_OUT)                     # (224, 16)
    wx = _interp_matrix(W_IN, W_OUT)                     # (224, 16)
    wy_r = wy.reshape(NP_Y, PATCH, H_IN)                 # (7, 32, 16)
    wx_r = wx.reshape(NP_X, PATCH, W_IN)                 # (7, 32, 16)
    wp_r = params["w_patch"].reshape(C_IN, PATCH, PATCH, D_HID)  # (3, 32, 32, 64)
    # w_eff[(c,h,w), (i,j,d)] = sum_{y,x} wy[i,y,h] * wx[j,x,w] * wp[c,y,x,d]
    t = jnp.einsum("iyh,cyxd->cihxd", wy_r, wp_r)        # (3, 7, 16, 32, 64)  f32
    w_eff = jnp.einsum("jxw,cihxd->chwijd", wx_r, t)     # (3, 16, 16, 7, 7, 64) f32
    w_eff = w_eff.reshape(K_IMG, NPATCH, D_HID)
    # Fold the mean-pool over patches into the weight (== w_eff @ pool), then
    # cast once to bf16: (768, 64) ~= 96 KiB instead of 4.6 MiB + 0.77 MiB.
    w_pooled = jnp.mean(w_eff, axis=1).astype(jnp.bfloat16)
    return {
        "w_pooled": w_pooled,                                        # (768, 64) bf16
        "ln_g_img": params["ln_g_img"], "ln_b_img": params["ln_b_img"],
        "w_proj_img": params["w_proj_img"].astype(jnp.bfloat16),
        "tok_emb": params["tok_emb"].astype(jnp.bfloat16),
        "ln_g_txt": params["ln_g_txt"], "ln_b_txt": params["ln_b_txt"],
        "w_proj_txt": params["w_proj_txt"].astype(jnp.bfloat16),
        # exp(logit_scale) / 100 precomputed: kernel epilogue is 1 - logits*c.
        "scale_over_100": (jnp.exp(params["log_scale"]) / 100.0),   # (1,) f32
    }


# ---------------- fused kernel helpers (traced inside the kernel) ------------
def _ln_proj_bf16(pooled_f32, g, b, wp_bf16):
    # LayerNorm in f32 on the VPU, projection on the bf16 MXU (f32 accum).
    mu = jnp.mean(pooled_f32, axis=-1, keepdims=True)
    var = jnp.mean(jnp.square(pooled_f32 - mu), axis=-1, keepdims=True)
    ln = (pooled_f32 - mu) * lax.rsqrt(var + LN_EPS)
    ln = ln * g + b
    return jnp.dot(ln.astype(jnp.bfloat16), wp_bf16,
                   preferred_element_type=jnp.float32)


def _l2norm(x):
    return x * lax.rsqrt(jnp.sum(x * x, axis=-1, keepdims=True) + L2_EPS)


# ---------------- the fused CLIPLoss kernel ----------------------------------
def _clip_fused_kernel(img_ref,                           # VMEM (B_IMG, K_IMG)  bf16
                       w_pool_ref,                        # VMEM (K_IMG, D_HID)  bf16
                       ln_g_img_ref, ln_b_img_ref,        # VMEM (1, D_HID)      f32
                       w_proj_img_ref,                    # VMEM (D_HID, D_EMB)  bf16
                       counts_ref,                        # VMEM (B_TXT, VOCAB)  bf16
                       tok_emb_ref,                       # VMEM (VOCAB, D_HID)  bf16
                       ln_g_txt_ref, ln_b_txt_ref,        # VMEM (1, D_HID)      f32
                       w_proj_txt_ref,                    # VMEM (D_HID, D_EMB)  bf16
                       scale_ref,                         # SMEM (1,)            f32
                       o_ref):                            # VMEM (B_IMG, B_TXT)  f32
    # ---- image tower: upsample+patchify+patch-embed+mean-pool, folded -------
    pooled_img = jnp.dot(img_ref[...], w_pool_ref[...],
                         preferred_element_type=jnp.float32)        # (B, 64)
    img_feat = _ln_proj_bf16(pooled_img, ln_g_img_ref[...], ln_b_img_ref[...],
                             w_proj_img_ref[...])                   # (B, 64)

    # ---- text tower: embedding gather + mean-pool as one counts matmul ------
    pooled_txt = jnp.dot(counts_ref[...], tok_emb_ref[...],
                         preferred_element_type=jnp.float32)        # (Bt, 64)
    txt_feat = _ln_proj_bf16(pooled_txt, ln_g_txt_ref[...], ln_b_txt_ref[...],
                             w_proj_txt_ref[...])                   # (Bt, 64)

    # ---- cosine-similarity logits + (1 - logits/100) epilogue (f32) ---------
    img_n = _l2norm(img_feat)
    txt_n = _l2norm(txt_feat)
    logits = lax.dot_general(img_n, txt_n, (((1,), (1,)), ((), ())),
                             preferred_element_type=jnp.float32)     # (B, Bt)
    o_ref[...] = 1.0 - logits * scale_ref[0]


# ---------------- wrapper -----------------------------------------------------
@jax.jit
def clip_loss_forward(image, text_tokens, folded):
    b_img = image.shape[0]
    b_txt, seq = text_tokens.shape
    # (B, C*H*W) bf16: the single in-kernel contraction with w_pooled realizes
    # upsample -> patchify -> patch-embed -> mean-pool without materializing
    # the 224x224 image or the (B, NPATCH, D_HID) tokens.
    img_flat = image.reshape(b_img, -1).astype(jnp.bfloat16)
    # One-hot counts / seq -> mean of token embeddings expressed as a matmul.
    counts = (jax.nn.one_hot(text_tokens, VOCAB, dtype=jnp.float32).sum(axis=1)
              / seq).astype(jnp.bfloat16)

    vmem = pl.BlockSpec(memory_space=pltpu.MemorySpace.VMEM)
    smem = pl.BlockSpec(memory_space=pltpu.MemorySpace.SMEM)

    # NOTE: total resident VMEM is ~0.3 MiB, so a grid-less launch needs no
    # tiling.  Before scaling batch / width: keep resident bytes <= ~48 MiB
    # (v7x has only 64 MiB physical VMEM) and add a leading 'parallel' batch
    # grid axis so v7x's two TensorCores split the work.
    return pl.pallas_call(
        _clip_fused_kernel,
        out_shape=jax.ShapeDtypeStruct((b_img, b_txt), jnp.float32),
        in_specs=[
            vmem,               # img_flat (bf16)
            vmem,               # w_pooled (bf16)
            vmem, vmem, vmem,   # ln_g_img, ln_b_img (f32), w_proj_img (bf16)
            vmem,               # counts (bf16)
            vmem,               # tok_emb (bf16)
            vmem, vmem, vmem,   # ln_g_txt, ln_b_txt (f32), w_proj_txt (bf16)
            smem,               # exp(logit_scale)/100
        ],
        out_specs=vmem,
    )(img_flat, folded["w_pooled"],
      folded["ln_g_img"], folded["ln_b_img"], folded["w_proj_img"],
      counts, folded["tok_emb"],
      folded["ln_g_txt"], folded["ln_b_txt"], folded["w_proj_txt"],
      folded["scale_over_100"])


# ---------------- synthetic CLIP weights --------------------------------------
def init_params(key):
    ks = jax.random.split(key, 5)
    k_patch = C_IN * PATCH * PATCH
    return {
        "w_patch": 0.02 * jax.random.normal(ks[0], (k_patch, D_HID), jnp.float32),
        "ln_g_img": jnp.ones((1, D_HID), jnp.float32),
        "ln_b_img": jnp.zeros((1, D_HID), jnp.float32),
        "w_proj_img": 0.02 * jax.random.normal(ks[1], (D_HID, D_EMB), jnp.float32),
        "tok_emb": 0.02 * jax.random.normal(ks[2], (VOCAB, D_HID), jnp.float32),
        "ln_g_txt": jnp.ones((1, D_HID), jnp.float32),
        "ln_b_txt": jnp.zeros((1, D_HID), jnp.float32),
        "w_proj_txt": 0.02 * jax.random.normal(ks[3], (D_HID, D_EMB), jnp.float32),
        # CLIP logit_scale init: ln(1/0.07); exp() folded at precompute time.
        "log_scale": jnp.full((1,), jnp.log(1.0 / 0.07), jnp.float32),
    }


# ---------------- pure-JAX f32 reference (un-folded pipeline) -----------------
def reference_forward(image, text_tokens, params):
    wy = _interp_matrix(H_IN, H_OUT)
    wx = _interp_matrix(W_IN, W_OUT)
    up = jnp.einsum("oh,bchw->bcow", wy, image)
    up = jnp.einsum("pw,bcow->bcop", wx, up)                      # (B,C,224,224)
    patches = up.reshape(image.shape[0], C_IN, NP_Y, PATCH, NP_X, PATCH)
    patches = patches.transpose(0, 2, 4, 1, 3, 5).reshape(
        image.shape[0], NPATCH, C_IN * PATCH * PATCH)
    tok = patches @ params["w_patch"]                             # (B,NPATCH,D)
    pooled_img = tok.mean(axis=1)

    def _ln(x, g, b):
        mu = x.mean(-1, keepdims=True)
        var = ((x - mu) ** 2).mean(-1, keepdims=True)
        return (x - mu) * lax.rsqrt(var + LN_EPS) * g + b

    img_feat = _ln(pooled_img, params["ln_g_img"], params["ln_b_img"]) @ params["w_proj_img"]
    pooled_txt = params["tok_emb"][text_tokens].mean(axis=1)
    txt_feat = _ln(pooled_txt, params["ln_g_txt"], params["ln_b_txt"]) @ params["w_proj_txt"]
    img_n = img_feat / jnp.linalg.norm(img_feat, axis=-1, keepdims=True)
    txt_n = txt_feat / jnp.linalg.norm(txt_feat, axis=-1, keepdims=True)
    logits = jnp.exp(params["log_scale"][0]) * (img_n @ txt_n.T)
    return 1.0 - logits / 100.0


if __name__ == "__main__":
    key = jax.random.PRNGKey(0)
    k_img, k_txt, k_par = jax.random.split(key, 3)

    image = jax.random.normal(k_img, (B_IMG, C_IN, H_IN, W_IN), jnp.float32)
    text = jax.random.randint(k_txt, (B_TXT, SEQ), 0, VOCAB, jnp.int32)
    params = init_params(k_par)

    folded = precompute_folded(params)      # one-time f32 fold, bf16 cast last
    folded = jax.tree_util.tree_map(jax.block_until_ready, folded)

    out = clip_loss_forward(image, text, folded)
    out = jax.block_until_ready(out)

    assert out.shape == (B_IMG, B_TXT), out.shape
    assert out.dtype == jnp.float32
    assert bool(jnp.all(jnp.isfinite(out)))

    # f32 reference of the un-folded pipeline; bf16-level tolerance.
    ref = reference_forward(image, text, params)
    assert bool(jnp.allclose(out, ref, atol=3e-2, rtol=3e-2)), (out, ref)

    print("KERNEL_OK")
</pallas_src>

<mosaic_0001>
module attributes {stable_mosaic.version = 11 : i64} {
  func.func @_clip_fused_kernel(%arg0: memref<2x768xbf16, #tpu.memory_space<vmem>>, %arg1: memref<768x64xbf16, #tpu.memory_space<vmem>>, %arg2: memref<1x64xf32, #tpu.memory_space<vmem>>, %arg3: memref<1x64xf32, #tpu.memory_space<vmem>>, %arg4: memref<64x64xbf16, #tpu.memory_space<vmem>>, %arg5: memref<2x64xbf16, #tpu.memory_space<vmem>>, %arg6: memref<64x64xbf16, #tpu.memory_space<vmem>>, %arg7: memref<1x64xf32, #tpu.memory_space<vmem>>, %arg8: memref<1x64xf32, #tpu.memory_space<vmem>>, %arg9: memref<64x64xbf16, #tpu.memory_space<vmem>>, %arg10: memref<1xf32, #tpu.memory_space<smem>>, %arg11: memref<2x2xf32, #tpu.memory_space<vmem>>) attributes {dimension_semantics = [], scalar_prefetch = 0 : i64, scratch_operands = 0 : i64, tpu.core_type = #tpu.core_type<tc>} {
    %c0 = arith.constant 0 : index
    %c0_0 = arith.constant 0 : index
    %0 = vector.load %arg0[%c0, %c0_0] : memref<2x768xbf16, #tpu.memory_space<vmem>>, vector<2x768xbf16>
    %c0_1 = arith.constant 0 : index
    %c0_2 = arith.constant 0 : index
    %1 = vector.load %arg1[%c0_1, %c0_2] : memref<768x64xbf16, #tpu.memory_space<vmem>>, vector<768x64xbf16>
    %cst = arith.constant dense<0.000000e+00> : vector<2x64xf32>
    %2 = tpu.matmul %0, %1, %cst {dimension_numbers = #tpu.dot_dimension_numbers<[1], [0], [0], [1], [0, 0, 1, 1], [], []>} : vector<2x768xbf16>, vector<768x64xbf16>, vector<2x64xf32> -> vector<2x64xf32>
    %c0_3 = arith.constant 0 : index
    %c0_4 = arith.constant 0 : index
    %3 = vector.load %arg2[%c0_3, %c0_4] : memref<1x64xf32, #tpu.memory_space<vmem>>, vector<1x64xf32>
    %c0_5 = arith.constant 0 : index
    %c0_6 = arith.constant 0 : index
    %4 = vector.load %arg3[%c0_5, %c0_6] : memref<1x64xf32, #tpu.memory_space<vmem>>, vector<1x64xf32>
    %c0_7 = arith.constant 0 : index
    %c0_8 = arith.constant 0 : index
    %5 = vector.load %arg4[%c0_7, %c0_8] : memref<64x64xbf16, #tpu.memory_space<vmem>>, vector<64x64xbf16>
    %cst_9 = arith.constant dense<0.000000e+00> : vector<2xf32>
    %6 = vector.multi_reduction <add>, %2, %cst_9 [1] : vector<2x64xf32> to vector<2xf32>
    %7 = vector.shape_cast %6 : vector<2xf32> to vector<2x1xf32>
    %cst_10 = arith.constant 6.400000e+01 : f32
    %8 = vector.broadcast %cst_10 : f32 to vector<2x1xf32>
    %9 = arith.divf %7, %8 : vector<2x1xf32>
    %10 = vector.broadcast %9 : vector<2x1xf32> to vector<2x64xf32>
    %11 = arith.subf %2, %10 : vector<2x64xf32>
    %12 = arith.mulf %11, %11 : vector<2x64xf32>
    %cst_11 = arith.constant dense<0.000000e+00> : vector<2xf32>
    %13 = vector.multi_reduction <add>, %12, %cst_11 [1] : vector<2x64xf32> to vector<2xf32>
    %14 = vector.shape_cast %13 : vector<2xf32> to vector<2x1xf32>
    %cst_12 = arith.constant 6.400000e+01 : f32
    %15 = vector.broadcast %cst_12 : f32 to vector<2x1xf32>
    %16 = arith.divf %14, %15 : vector<2x1xf32>
    %17 = vector.broadcast %9 : vector<2x1xf32> to vector<2x64xf32>
    %18 = arith.subf %2, %17 : vector<2x64xf32>
    %cst_13 = arith.constant 9.99999974E-6 : f32
    %19 = vector.broadcast %cst_13 : f32 to vector<2x1xf32>
    %20 = arith.addf %16, %19 : vector<2x1xf32>
    %21 = math.rsqrt %20 : vector<2x1xf32>
    %22 = vector.broadcast %21 : vector<2x1xf32> to vector<2x64xf32>
    %23 = arith.mulf %18, %22 : vector<2x64xf32>
    %24 = vector.broadcast %3 : vector<1x64xf32> to vector<2x64xf32>
    %25 = arith.mulf %23, %24 : vector<2x64xf32>
    %26 = vector.broadcast %4 : vector<1x64xf32> to vector<2x64xf32>
    %27 = arith.addf %25, %26 : vector<2x64xf32>
    %28 = arith.truncf %27 : vector<2x64xf32> to vector<2x64xbf16>
    %cst_14 = arith.constant dense<0.000000e+00> : vector<2x64xf32>
    %29 = tpu.matmul %28, %5, %cst_14 {dimension_numbers = #tpu.dot_dimension_numbers<[1], [0], [0], [1], [0, 0, 1, 1], [], []>} : vector<2x64xbf16>, vector<64x64xbf16>, vector<2x64xf32> -> vector<2x64xf32>
    %c0_15 = arith.constant 0 : index
    %c0_16 = arith.constant 0 : index
    %30 = vector.load %arg5[%c0_15, %c0_16] : memref<2x64xbf16, #tpu.memory_space<vmem>>, vector<2x64xbf16>
    %c0_17 = arith.constant 0 : index
    %c0_18 = arith.constant 0 : index
    %31 = vector.load %arg6[%c0_17, %c0_18] : memref<64x64xbf16, #tpu.memory_space<vmem>>, vector<64x64xbf16>
    %cst_19 = arith.constant dense<0.000000e+00> : vector<2x64xf32>
    %32 = tpu.matmul %30, %31, %cst_19 {dimension_numbers = #tpu.dot_dimension_numbers<[1], [0], [0], [1], [0, 0, 1, 1], [], []>} : vector<2x64xbf16>, vector<64x64xbf16>, vector<2x64xf32> -> vector<2x64xf32>
    %c0_20 = arith.constant 0 : index
    %c0_21 = arith.constant 0 : index
    %33 = vector.load %arg7[%c0_20, %c0_21] : memref<1x64xf32, #tpu.memory_space<vmem>>, vector<1x64xf32>
    %c0_22 = arith.constant 0 : index
    %c0_23 = arith.constant 0 : index
    %34 = vector.load %arg8[%c0_22, %c0_23] : memref<1x64xf32, #tpu.memory_space<vmem>>, vector<1x64xf32>
    %c0_24 = arith.constant 0 : index
    %c0_25 = arith.constant 0 : index
    %35 = vector.load %arg9[%c0_24, %c0_25] : memref<64x64xbf16, #tpu.memory_space<vmem>>, vector<64x64xbf16>
    %cst_26 = arith.constant dense<0.000000e+00> : vector<2xf32>
    %36 = vector.multi_reduction <add>, %32, %cst_26 [1] : vector<2x64xf32> to vector<2xf32>
    %37 = vector.shape_cast %36 : vector<2xf32> to vector<2x1xf32>
    %cst_27 = arith.constant 6.400000e+01 : f32
    %38 = vector.broadcast %cst_27 : f32 to vector<2x1xf32>
    %39 = arith.divf %37, %38 : vector<2x1xf32>
    %40 = vector.broadcast %39 : vector<2x1xf32> to vector<2x64xf32>
    %41 = arith.subf %32, %40 : vector<2x64xf32>
    %42 = arith.mulf %41, %41 : vector<2x64xf32>
    %cst_28 = arith.constant dense<0.000000e+00> : vector<2xf32>
    %43 = vector.multi_reduction <add>, %42, %cst_28 [1] : vector<2x64xf32> to vector<2xf32>
    %44 = vector.shape_cast %43 : vector<2xf32> to vector<2x1xf32>
    %cst_29 = arith.constant 6.400000e+01 : f32
    %45 = vector.broadcast %cst_29 : f32 to vector<2x1xf32>
    %46 = arith.divf %44, %45 : vector<2x1xf32>
    %47 = vector.broadcast %39 : vector<2x1xf32> to vector<2x64xf32>
    %48 = arith.subf %32, %47 : vector<2x64xf32>
    %cst_30 = arith.constant 9.99999974E-6 : f32
    %49 = vector.broadcast %cst_30 : f32 to vector<2x1xf32>
    %50 = arith.addf %46, %49 : vector<2x1xf32>
    %51 = math.rsqrt %50 : vector<2x1xf32>
    %52 = vector.broadcast %51 : vector<2x1xf32> to vector<2x64xf32>
    %53 = arith.mulf %48, %52 : vector<2x64xf32>
    %54 = vector.broadcast %33 : vector<1x64xf32> to vector<2x64xf32>
    %55 = arith.mulf %53, %54 : vector<2x64xf32>
    %56 = vector.broadcast %34 : vector<1x64xf32> to vector<2x64xf32>
    %57 = arith.addf %55, %56 : vector<2x64xf32>
    %58 = arith.truncf %57 : vector<2x64xf32> to vector<2x64xbf16>
    %cst_31 = arith.constant dense<0.000000e+00> : vector<2x64xf32>
    %59 = tpu.matmul %58, %35, %cst_31 {dimension_numbers = #tpu.dot_dimension_numbers<[1], [0], [0], [1], [0, 0, 1, 1], [], []>} : vector<2x64xbf16>, vector<64x64xbf16>, vector<2x64xf32> -> vector<2x64xf32>
    %60 = arith.mulf %29, %29 : vector<2x64xf32>
    %cst_32 = arith.constant dense<0.000000e+00> : vector<2xf32>
    %61 = vector.multi_reduction <add>, %60, %cst_32 [1] : vector<2x64xf32> to vector<2xf32>
    %62 = vector.shape_cast %61 : vector<2xf32> to vector<2x1xf32>
    %cst_33 = arith.constant 9.99999996E-13 : f32
    %63 = vector.broadcast %cst_33 : f32 to vector<2x1xf32>
    %64 = arith.addf %62, %63 : vector<2x1xf32>
    %65 = math.rsqrt %64 : vector<2x1xf32>
    %66 = vector.broadcast %65 : vector<2x1xf32> to vector<2x64xf32>
    %67 = arith.mulf %29, %66 : vector<2x64xf32>
    %68 = arith.mulf %59, %59 : vector<2x64xf32>
    %cst_34 = arith.constant dense<0.000000e+00> : vector<2xf32>
    %69 = vector.multi_reduction <add>, %68, %cst_34 [1] : vector<2x64xf32> to vector<2xf32>
    %70 = vector.shape_cast %69 : vector<2xf32> to vector<2x1xf32>
    %cst_35 = arith.constant 9.99999996E-13 : f32
    %71 = vector.broadcast %cst_35 : f32 to vector<2x1xf32>
    %72 = arith.addf %70, %71 : vector<2x1xf32>
    %73 = math.rsqrt %72 : vector<2x1xf32>
    %74 = vector.broadcast %73 : vector<2x1xf32> to vector<2x64xf32>
    %75 = arith.mulf %59, %74 : vector<2x64xf32>
    %cst_36 = arith.constant dense<0.000000e+00> : vector<2x2xf32>
    %76 = tpu.matmul %67, %75, %cst_36 {dimension_numbers = #tpu.dot_dimension_numbers<[1], [1], [0], [0], [0, 0, 1, 0], [], []>} : vector<2x64xf32>, vector<2x64xf32>, vector<2x2xf32> -> vector<2x2xf32>
    %c0_37 = arith.constant 0 : index
    %77 = memref.load %arg10[%c0_37] : memref<1xf32, #tpu.memory_space<smem>>
    %78 = vector.broadcast %77 : f32 to vector<2x2xf32>
    %79 = arith.mulf %76, %78 : vector<2x2xf32>
    %cst_38 = arith.constant 1.000000e+00 : f32
    %80 = vector.broadcast %cst_38 : f32 to vector<2x2xf32>
    %81 = arith.subf %80, %79 : vector<2x2xf32>
    %c0_39 = arith.constant 0 : index
    %c0_40 = arith.constant 0 : index
    %82 = vector.load %arg11[%c0_39, %c0_40] : memref<2x2xf32, #tpu.memory_space<vmem>>, vector<2x2xf32>
    tpu.vector_store %arg11[%c0_39, %c0_40], %81 {strides = array<i32>} : memref<2x2xf32, #tpu.memory_space<vmem>>, vector<2x2xf32>,
    return
  }
}

</mosaic_0001>

<llo_original>
// kernel: clip_loss_forward.1
$region0: #{clip_loss_forward.1}
  #allocation0 [shape = 'u32[]', space=smem, size = 0x4, offset = 0x4, fixed_abs, tag = 'smem constant byte address 0x4 - core index']
  #allocation1 [shape = 'u32[144,128]{1,0:T(1,128)}', space=vmem, size = 0x12000, scoped, tag = 'internal scratch']
  #allocation2 [shape = 'f32[1]{0:T(128)S(6)}', space=smem, size = 0x200, scoped, tag = 'scoped memory for clip_loss_forward.1']
  %s0 = inlined_call_operand.vmem [shape: bf16[2,768], index: 0, kind: input, shape index: {}]
  %s1 = inlined_call_operand.vmem [shape: bf16[768,64], index: 1, kind: input, shape index: {}]
  %s2 = inlined_call_operand.vmem [shape: f32[1,64], index: 2, kind: input, shape index: {}]
  %s3 = inlined_call_operand.vmem [shape: f32[1,64], index: 3, kind: input, shape index: {}]
  %s4 = inlined_call_operand.vmem [shape: bf16[64,64], index: 4, kind: input, shape index: {}]
  %s5 = inlined_call_operand.vmem [shape: bf16[2,64], index: 5, kind: input, shape index: {}]
  %s6 = inlined_call_operand.vmem [shape: bf16[64,64], index: 6, kind: input, shape index: {}]
  %s7 = inlined_call_operand.vmem [shape: f32[1,64], index: 7, kind: input, shape index: {}]
  %s8 = inlined_call_operand.vmem [shape: f32[1,64], index: 8, kind: input, shape index: {}]
  %s9 = inlined_call_operand.vmem [shape: bf16[64,64], index: 9, kind: input, shape index: {}]
  %s10 = inlined_call_operand.<no memory space> [shape: f32[1], index: 10, kind: input, shape index: {}]
  %s11 = inlined_call_operand.hbm [shape: f32[2,2], index: 11, kind: output, shape index: {}]
  %s12 = sld [smem:[#allocation0]]
  $region54: #{clip_loss_forward.1} parent=0
    _
  %s14 = ssub.s32 1, %s12
  %s15 = scalar_select 0, %s14, %s12
  %16 = sst [smem:[#allocation2]] %s10
  $region1: #{clip_loss_forward.1} parent=0
    #allocation3 [shape = 'u8[1024]{0}', space=vmem, size = 0x400, scoped, tag = 'output window, operand 0, single buffered']
    #allocation4 [shape = 's32[1]{0}', space=sflag, size = 0x4, scoped, tag = 'scoped memory for clip_loss_forward.1']
    %17 = vsyncpa [#allocation4], 0
    // Predicated region
    $region2: #{clip_loss_forward.1} parent=1 // pred_check
      _
    $region3: #{clip_loss_forward.1} parent=1 // pred_check_branch
      %19 = sbr.rel (0) target = $region5
    $region4: #{clip_loss_forward.1} parent=1 // pred_region
      _
    $region5: #{clip_loss_forward.1} parent=1 // pred_fallthru
      _
    // Predicated region
    $region6: #{clip_loss_forward.1} parent=1 // pred_check
      _
    $region7: #{clip_loss_forward.1} parent=1 // pred_check_branch
      %21 = sbr.rel (0) target = $region9
    $region8: #{clip_loss_forward.1} parent=1 // pred_region
      _
    $region9: #{clip_loss_forward.1} parent=1 // pred_fallthru
      _
    // Predicated region
    $region10: #{clip_loss_forward.1} parent=1 // pred_check
      _
    $region11: #{clip_loss_forward.1} parent=1 // pred_check_branch
      %23 = sbr.rel (0) target = $region13
    $region12: #{clip_loss_forward.1} parent=1 // pred_region
      _
    $region13: #{clip_loss_forward.1} parent=1 // pred_fallthru
      _
    // Predicated region
    $region14: #{clip_loss_forward.1} parent=1 // pred_check
      _
    $region15: #{clip_loss_forward.1} parent=1 // pred_check_branch
      %25 = sbr.rel (0) target = $region17
    $region16: #{clip_loss_forward.1} parent=1 // pred_region
      _
    $region17: #{clip_loss_forward.1} parent=1 // pred_fallthru
      _
    // Predicated region
    $region18: #{clip_loss_forward.1} parent=1 // pred_check
      _
    $region19: #{clip_loss_forward.1} parent=1 // pred_check_branch
      %27 = sbr.rel (0) target = $region21
    $region20: #{clip_loss_forward.1} parent=1 // pred_region
      _
    $region21: #{clip_loss_forward.1} parent=1 // pred_fallthru
      _
    // Predicated region
    $region22: #{clip_loss_forward.1} parent=1 // pred_check
      _
    $region23: #{clip_loss_forward.1} parent=1 // pred_check_branch
      %29 = sbr.rel (0) target = $region25
    $region24: #{clip_loss_forward.1} parent=1 // pred_region
      _
    $region25: #{clip_loss_forward.1} parent=1 // pred_fallthru
      _
    // Predicated region
    $region26: #{clip_loss_forward.1} parent=1 // pred_check
      _
    $region27: #{clip_loss_forward.1} parent=1 // pred_check_branch
      %31 = sbr.rel (0) target = $region29
    $region28: #{clip_loss_forward.1} parent=1 // pred_region
      _
    $region29: #{clip_loss_forward.1} parent=1 // pred_fallthru
      _
    // Predicated region
    $region30: #{clip_loss_forward.1} parent=1 // pred_check
      _
    $region31: #{clip_loss_forward.1} parent=1 // pred_check_branch
      %33 = sbr.rel (0) target = $region33
    $region32: #{clip_loss_forward.1} parent=1 // pred_region
      _
    $region33: #{clip_loss_forward.1} parent=1 // pred_fallthru
      _
    // Predicated region
    $region34: #{clip_loss_forward.1} parent=1 // pred_check
      _
    $region35: #{clip_loss_forward.1} parent=1 // pred_check_branch
      %35 = sbr.rel (0) target = $region37
    $region36: #{clip_loss_forward.1} parent=1 // pred_region
      _
    $region37: #{clip_loss_forward.1} parent=1 // pred_fallthru
      _
    // Predicated region
    $region38: #{clip_loss_forward.1} parent=1 // pred_check
      _
    $region39: #{clip_loss_forward.1} parent=1 // pred_check_branch
      %37 = sbr.rel (0) target = $region41
    $region40: #{clip_loss_forward.1} parent=1 // pred_region
      _
    $region41: #{clip_loss_forward.1} parent=1 // pred_fallthru
      _
    // Predicated region
    $region42: #{clip_loss_forward.1} parent=1 // pred_check
      _
    $region43: #{clip_loss_forward.1} parent=1 // pred_check_branch
      %39 = sbr.rel (0) target = $region45
    $region44: #{clip_loss_forward.1} parent=1 // pred_region
      _
    $region45: #{clip_loss_forward.1} parent=1 // pred_fallthru
      _
    %v41 = vld [vmem:[%s0] sm:$0x3f]
    %v42 = vld [vmem:[%s1] sm:$0xf]
    %v43 = vld [vmem:[%s1 + $0x4] sm:$0xf]
    %v44 = vld [vmem:[%s1 + $0x8] sm:$0xf]
    %v45 = vld [vmem:[%s1 + $0xc] sm:$0xf]
    %v46 = vld [vmem:[%s1 + $0x10] sm:$0xf]
    %v47 = vld [vmem:[%s1 + $0x14] sm:$0xf]
    %v48 = vld [vmem:[%s1 + $0x18] sm:$0xf]
    %v49 = vld [vmem:[%s1 + $0x1c] sm:$0xf]
    %v50 = vld [vmem:[%s1 + $0x20] sm:$0xf]
    %v51 = vld [vmem:[%s1 + $0x24] sm:$0xf]
    %v52 = vld [vmem:[%s1 + $0x28] sm:$0xf]
    %v53 = vld [vmem:[%s1 + $0x2c] sm:$0xf]
    %v54 = vld [vmem:[%s1 + $0x30] sm:$0xf]
    %v55 = vld [vmem:[%s1 + $0x34] sm:$0xf]
    %v56 = vld [vmem:[%s1 + $0x38] sm:$0xf]
    %v57 = vld [vmem:[%s1 + $0x3c] sm:$0xf]
    %v58 = vld [vmem:[%s1 + $0x40] sm:$0xf]
    %v59 = vld [vmem:[%s1 + $0x44] sm:$0xf]
    %v60 = vld [vmem:[%s1 + $0x48] sm:$0xf]
    %v61 = vld [vmem:[%s1 + $0x4c] sm:$0xf]
    %v62 = vld [vmem:[%s1 + $0x50] sm:$0xf]
    %v63 = vld [vmem:[%s1 + $0x54] sm:$0xf]
    %v64 = vld [vmem:[%s1 + $0x58] sm:$0xf]
    %v65 = vld [vmem:[%s1 + $0x5c] sm:$0xf]
    %v66 = vld [vmem:[%s1 + $0x60] sm:$0xf]
    %v67 = vld [vmem:[%s1 + $0x64] sm:$0xf]
    %v68 = vld [vmem:[%s1 + $0x68] sm:$0xf]
    %v69 = vld [vmem:[%s1 + $0x6c] sm:$0xf]
    %v70 = vld [vmem:[%s1 + $0x70] sm:$0xf]
    %v71 = vld [vmem:[%s1 + $0x74] sm:$0xf]
    %v72 = vld [vmem:[%s1 + $0x78] sm:$0xf]
    %v73 = vld [vmem:[%s1 + $0x7c] sm:$0xf]
    %v74 = vld [vmem:[%s1 + $0x80] sm:$0xf]
    %v75 = vld [vmem:[%s1 + $0x84] sm:$0xf]
    %v76 = vld [vmem:[%s1 + $0x88] sm:$0xf]
    %v77 = vld [vmem:[%s1 + $0x8c] sm:$0xf]
    %v78 = vld [vmem:[%s1 + $0x90] sm:$0xf]
    %v79 = vld [vmem:[%s1 + $0x94] sm:$0xf]
    %v80 = vld [vmem:[%s1 + $0x98] sm:$0xf]
    %v81 = vld [vmem:[%s1 + $0x9c] sm:$0xf]
    %v82 = vld [vmem:[%s1 + $0xa0] sm:$0xf]
    %v83 = vld [vmem:[%s1 + $0xa4] sm:$0xf]
    %v84 = vld [vmem:[%s1 + $0xa8] sm:$0xf]
    %v85 = vld [vmem:[%s1 + $0xac] sm:$0xf]
    %v86 = vld [vmem:[%s1 + $0xb0] sm:$0xf]
    %v87 = vld [vmem:[%s1 + $0xb4] sm:$0xf]
    %v88 = vld [vmem:[%s1 + $0xb8] sm:$0xf]
    %v89 = vld [vmem:[%s1 + $0xbc] sm:$0xf]
    %v90 = vld [vmem:[%s1 + $0xc0] sm:$0xf]
    %v91 = vld [vmem:[%s1 + $0xc4] sm:$0xf]
    %v92 = vld [vmem:[%s1 + $0xc8] sm:$0xf]
    %v93 = vld [vmem:[%s1 + $0xcc] sm:$0xf]
    %v94 = vld [vmem:[%s1 + $0xd0] sm:$0xf]
    %v95 = vld [vmem:[%s1 + $0xd4] sm:$0xf]
    %v96 = vld [vmem:[%s1 + $0xd8] sm:$0xf]
    %v97 = vld [vmem:[%s1 + $0xdc] sm:$0xf]
    %v98 = vld [vmem:[%s1 + $0xe0] sm:$0xf]
    %v99 = vld [vmem:[%s1 + $0xe4] sm:$0xf]
    %v100 = vld [vmem:[%s1 + $0xe8] sm:$0xf]
    %v101 = vld [vmem:[%s1 + $0xec] sm:$0xf]
    %v102 = vld [vmem:[%s1 + $0xf0] sm:$0xf]
    %v103 = vld [vmem:[%s1 + $0xf4] sm:$0xf]
    %v104 = vld [vmem:[%s1 + $0xf8] sm:$0xf]
    %v105 = vld [vmem:[%s1 + $0xfc] sm:$0xf]
    %v106 = vld [vmem:[%s1 + $0x100] sm:$0xf]
    %v107 = vld [vmem:[%s1 + $0x104] sm:$0xf]
    %v108 = vld [vmem:[%s1 + $0x108] sm:$0xf]
    %v109 = vld [vmem:[%s1 + $0x10c] sm:$0xf]
    %v110 = vld [vmem:[%s1 + $0x110] sm:$0xf]
    %v111 = vld [vmem:[%s1 + $0x114] sm:$0xf]
    %v112 = vld [vmem:[%s1 + $0x118] sm:$0xf]
    %v113 = vld [vmem:[%s1 + $0x11c] sm:$0xf]
    %v114 = vld [vmem:[%s1 + $0x120] sm:$0xf]
    %v115 = vld [vmem:[%s1 + $0x124] sm:$0xf]
    %v116 = vld [vmem:[%s1 + $0x128] sm:$0xf]
    %v117 = vld [vmem:[%s1 + $0x12c] sm:$0xf]
    %v118 = vld [vmem:[%s1 + $0x130] sm:$0xf]
    %v119 = vld [vmem:[%s1 + $0x134] sm:$0xf]
    %v120 = vld [vmem:[%s1 + $0x138] sm:$0xf]
    %v121 = vld [vmem:[%s1 + $0x13c] sm:$0xf]
    %v122 = vld [vmem:[%s1 + $0x140] sm:$0xf]
    %v123 = vld [vmem:[%s1 + $0x144] sm:$0xf]
    %v124 = vld [vmem:[%s1 + $0x148] sm:$0xf]
    %v125 = vld [vmem:[%s1 + $0x14c] sm:$0xf]
    %v126 = vld [vmem:[%s1 + $0x150] sm:$0xf]
    %v127 = vld [vmem:[%s1 + $0x154] sm:$0xf]
    %v128 = vld [vmem:[%s1 + $0x158] sm:$0xf]
    %v129 = vld [vmem:[%s1 + $0x15c] sm:$0xf]
    %v130 = vld [vmem:[%s1 + $0x160] sm:$0xf]
    %v131 = vld [vmem:[%s1 + $0x164] sm:$0xf]
    %v132 = vld [vmem:[%s1 + $0x168] sm:$0xf]
    %v133 = vld [vmem:[%s1 + $0x16c] sm:$0xf]
    %v134 = vld [vmem:[%s1 + $0x170] sm:$0xf]
    %v135 = vld [vmem:[%s1 + $0x174] sm:$0xf]
    %v136 = vld [vmem:[%s1 + $0x178] sm:$0xf]
    %v137 = vld [vmem:[%s1 + $0x17c] sm:$0xf]
    %v139 = vcombine.high %v41, %v41
    %v141 = vunpack.c.l.s4 1966171168
    %v142 = vunpack.c.0.s8 %v141
    %v143 = vlaneseq
    %v144 = vshrl.u32 %v143, 7
    %v145 = vsub.s32 %v142, %v144
    %v146 = vrot.slane %v41, %v145
    %v148 = vunpack.c.l.s4 1966171168
    %v149 = vunpack.c.0.s8 %v148
    %v150 = vlaneseq
    %v151 = vshrl.u32 %v150, 7
    %v152 = vsub.s32 %v149, %v151
    %v153 = vrot.slane %v139, %v152
    %v154 = vcombine.high %v146, %v146
    %v155 = vcombine.high %v153, %v153
    %v157 = vunpack.c.l.s4 1966171168
    %v158 = vunpack.c.0.s8 %v157
    %v159 = vlaneseq
    %v160 = vshrl.u32 %v159, 7
    %v161 = vsub.s32 %v158, %v160
    %v162 = vrot.slane %v146, %v161
    %v164 = vunpack.c.l.s4 1966171168
    %v165 = vunpack.c.0.s8 %v164
    %v166 = vlaneseq
    %v167 = vshrl.u32 %v166, 7
    %v168 = vsub.s32 %v165, %v167
    %v169 = vrot.slane %v153, %v168
    %v171 = vunpack.c.l.s4 1966171168
    %v172 = vunpack.c.0.s8 %v171
    %v173 = vlaneseq
    %v174 = vshrl.u32 %v173, 7
    %v175 = vsub.s32 %v172, %v174
    %v176 = vrot.slane %v154, %v175
    %v178 = vunpack.c.l.s4 1966171168
    %v179 = vunpack.c.0.s8 %v178
    %v180 = vlaneseq
    %v181 = vshrl.u32 %v180, 7
    %v182 = vsub.s32 %v179, %v181
    %v183 = vrot.slane %v155, %v182
    %v184 = vcombine.high %v162, %v162
    %v185 = vcombine.high %v176, %v176
    %v288 = vunpack.c.l.b16 %v42
    %v289 = vunpack.c.l.b16 %v43
    %v290 = vunpack.c.l.b16 %v44
    %v291 = vunpack.c.l.b16 %v45
    %v292 = vunpack.c.l.b16 %v46
    %v293 = vunpack.c.l.b16 %v47
    %v294 = vunpack.c.l.b16 %v48
    %v295 = vunpack.c.l.b16 %v49
    %v296 = vunpack.c.l.b16 %v50
    %v297 = vunpack.c.l.b16 %v51
    %v298 = vunpack.c.l.b16 %v52
    %v299 = vunpack.c.l.b16 %v53
    %v300 = vunpack.c.l.b16 %v54
    %v301 = vunpack.c.l.b16 %v55
    %v302 = vunpack.c.l.b16 %v56
    %v303 = vunpack.c.l.b16 %v57
    %v304 = vunpack.c.l.b16 %v58
    %v305 = vunpack.c.l.b16 %v59
    %v306 = vunpack.c.l.b16 %v60
    %v307 = vunpack.c.l.b16 %v61
    %v308 = vunpack.c.l.b16 %v62
    %v309 = vunpack.c.l.b16 %v63
    %v310 = vunpack.c.l.b16 %v64
    %v311 = vunpack.c.l.b16 %v65
    %v312 = vunpack.c.l.b16 %v66
    %v313 = vunpack.c.l.b16 %v67
    %v314 = vunpack.c.l.b16 %v68
    %v315 = vunpack.c.l.b16 %v69
    %v316 = vunpack.c.l.b16 %v70
    %v317 = vunpack.c.l.b16 %v71
    %v318 = vunpack.c.l.b16 %v72
    %v319 = vunpack.c.l.b16 %v73
    %v320 = vunpack.c.l.b16 %v74
    %v321 = vunpack.c.l.b16 %v75
    %v322 = vunpack.c.l.b16 %v76
    %v323 = vunpack.c.l.b16 %v77
    %v324 = vunpack.c.l.b16 %v78
    %v325 = vunpack.c.l.b16 %v79
    %v326 = vunpack.c.l.b16 %v80
    %v327 = vunpack.c.l.b16 %v81
    %v328 = vunpack.c.l.b16 %v82
    %v329 = vunpack.c.l.b16 %v83
    %v330 = vunpack.c.l.b16 %v84
    %v331 = vunpack.c.l.b16 %v85
    %v332 = vunpack.c.l.b16 %v86
    %v333 = vunpack.c.l.b16 %v87
    %v334 = vunpack.c.l.b16 %v88
    %v335 = vunpack.c.l.b16 %v89
    %v336 = vunpack.c.l.b16 %v90
    %v337 = vunpack.c.l.b16 %v91
    %v338 = vunpack.c.l.b16 %v92
    %v339 = vunpack.c.l.b16 %v93
    %v340 = vunpack.c.l.b16 %v94
    %v341 = vunpack.c.l.b16 %v95
    %v342 = vunpack.c.l.b16 %v96
    %v343 = vunpack.c.l.b16 %v97
    %v344 = vunpack.c.l.b16 %v98
    %v345 = vunpack.c.l.b16 %v99
    %v346 = vunpack.c.l.b16 %v100
    %v347 = vunpack.c.l.b16 %v101
    %v348 = vunpack.c.l.b16 %v102
    %v349 = vunpack.c.l.b16 %v103
    %v350 = vunpack.c.l.b16 %v104
    %v351 = vunpack.c.l.b16 %v105
    %v352 = vunpack.c.l.b16 %v106
    %v353 = vunpack.c.l.b16 %v107
    %v354 = vunpack.c.l.b16 %v108
    %v355 = vunpack.c.l.b16 %v109
    %v356 = vunpack.c.l.b16 %v110
    %v357 = vunpack.c.l.b16 %v111
    %v358 = vunpack.c.l.b16 %v112
    %v359 = vunpack.c.l.b16 %v113
    %v360 = vunpack.c.l.b16 %v114
    %v361 = vunpack.c.l.b16 %v115
    %v362 = vunpack.c.l.b16 %v116
    %v363 = vunpack.c.l.b16 %v117
    %v364 = vunpack.c.l.b16 %v118
    %v365 = vunpack.c.l.b16 %v119
    %v366 = vunpack.c.l.b16 %v120
    %v367 = vunpack.c.l.b16 %v121
    %v368 = vunpack.c.l.b16 %v122
    %v369 = vunpack.c.l.b16 %v123
    %v370 = vunpack.c.l.b16 %v124
    %v371 = vunpack.c.l.b16 %v125
    %v372 = vunpack.c.l.b16 %v126
    %v373 = vunpack.c.l.b16 %v127
    %v374 = vunpack.c.l.b16 %v128
    %v375 = vunpack.c.l.b16 %v129
    %v376 = vunpack.c.l.b16 %v130
    %v377 = vunpack.c.l.b16 %v131
    %v378 = vunpack.c.l.b16 %v132
    %v379 = vunpack.c.l.b16 %v133
    %v380 = vunpack.c.l.b16 %v134
    %v381 = vunpack.c.l.b16 %v135
    %v382 = vunpack.c.l.b16 %v136
    %v383 = vunpack.c.l.b16 %v137
    %v384 = vpack.c.b16 %v289, %v288
    %v385 = vpack.c.b16 %v291, %v290
    %v386 = vpack.c.b16 %v293, %v292
    %v387 = vpack.c.b16 %v295, %v294
    %v388 = vpack.c.b16 %v297, %v296
    %v389 = vpack.c.b16 %v299, %v298
    %v390 = vpack.c.b16 %v301, %v300
    %v391 = vpack.c.b16 %v303, %v302
    %v392 = vpack.c.b16 %v305, %v304
    %v393 = vpack.c.b16 %v307, %v306
    %v394 = vpack.c.b16 %v309, %v308
    %v395 = vpack.c.b16 %v311, %v310
    %v396 = vpack.c.b16 %v313, %v312
    %v397 = vpack.c.b16 %v315, %v314
    %v398 = vpack.c.b16 %v317, %v316
    %v399 = vpack.c.b16 %v319, %v318
    %v400 = vpack.c.b16 %v321, %v320
    %v401 = vpack.c.b16 %v323, %v322
    %v402 = vpack.c.b16 %v325, %v324
    %v403 = vpack.c.b16 %v327, %v326
    %v404 = vpack.c.b16 %v329, %v328
    %v405 = vpack.c.b16 %v331, %v330
    %v406 = vpack.c.b16 %v333, %v332
    %v407 = vpack.c.b16 %v335, %v334
    %v408 = vpack.c.b16 %v337, %v336
    %v409 = vpack.c.b16 %v339, %v338
    %v410 = vpack.c.b16 %v341, %v340
    %v411 = vpack.c.b16 %v343, %v342
    %v412 = vpack.c.b16 %v345, %v344
    %v413 = vpack.c.b16 %v347, %v346
    %v414 = vpack.c.b16 %v349, %v348
    %v415 = vpack.c.b16 %v351, %v350
    %v416 = vpack.c.b16 %v353, %v352
    %v417 = vpack.c.b16 %v355, %v354
    %v418 = vpack.c.b16 %v357, %v356
    %v419 = vpack.c.b16 %v359, %v358
    %v420 = vpack.c.b16 %v361, %v360
    %v421 = vpack.c.b16 %v363, %v362
    %v422 = vpack.c.b16 %v365, %v364
    %v423 = vpack.c.b16 %v367, %v366
    %v424 = vpack.c.b16 %v369, %v368
    %v425 = vpack.c.b16 %v371, %v370
    %v426 = vpack.c.b16 %v373, %v372
    %v427 = vpack.c.b16 %v375, %v374
    %v428 = vpack.c.b16 %v377, %v376
    %v429 = vpack.c.b16 %v379, %v378
    %v430 = vpack.c.b16 %v381, %v380
    %v431 = vpack.c.b16 %v383, %v382
    %480 = vmatprep.subr.bf16.mxu0 0
    %481 = vmatpush1.bf16.msra.mxu0 %v384
    %482 = vmatprep.subr.bf16.mxu0 0
    %483 = vmatpush1.bf16.msra.mxu0 %v385
    %484 = vmatprep.subr.bf16.mxu0 0
    %485 = vmatpush1.bf16.msra.mxu0 %v386
    %486 = vmatprep.subr.bf16.mxu0 0
    %487 = vmatpush1.bf16.msra.mxu0 %v387
    %488 = vmatprep.subr.bf16.mxu0 0
    %489 = vmatpush1.bf16.msra.mxu0 %v388
    %490 = vmatprep.subr.bf16.mxu0 0
    %491 = vmatpush1.bf16.msra.mxu0 %v389
    %492 = vmatprep.subr.bf16.mxu0 0
    %493 = vmatpush1.bf16.msra.mxu0 %v390
    %494 = vmatprep.subr.bf16.mxu0 0
    %495 = vmatpush1.bf16.msra.mxu0 %v391
    %496 = vmatprep.subr.bf16.mxu0 0
    %497 = vmatpush1.bf16.msra.mxu0 %v392
    %498 = vmatprep.subr.bf16.mxu0 0
    %499 = vmatpush1.bf16.msra.mxu0 %v393
    %500 = vmatprep.subr.bf16.mxu0 0
    %501 = vmatpush1.bf16.msra.mxu0 %v394
    %502 = vmatprep.subr.bf16.mxu0 0
    %503 = vmatpush1.bf16.msra.mxu0 %v395
    %504 = vmatprep.subr.bf16.mxu0 0
    %505 = vmatpush1.bf16.msra.mxu0 %v396
    %506 = vmatprep.subr.bf16.mxu0 0
    %507 = vmatpush1.bf16.msra.mxu0 %v397
    %508 = vmatprep.subr.bf16.mxu0 0
    %509 = vmatpush1.bf16.msra.mxu0 %v398
    %510 = vmatprep.subr.bf16.mxu0 0
    %511 = vmatpush1.bf16.msra.mxu0 %v399
    %512 = vmatprep.mubr.bf16.mxu0 %v176
    %513 = vmatmul.mubr.bf16.gmra.mrb[0].mxu0 %v162
    %v514 = vpop.f32.mrb[0].mxu0
    %v515 = vadd.f32 0.0, %v514
    %v516 = vpop.f32.mrb[0].mxu0
    %v517 = vpop.f32.mrb[0].mxu0
    %v518 = vpop.f32.mrb[0].mxu0
    %519 = vdwg.mxu0
    %520 = vmatprep.subr.bf16.mxu0 0
    %521 = vmatpush1.bf16.msra.mxu0 %v400
    %522 = vmatprep.subr.bf16.mxu0 0
    %523 = vmatpush1.bf16.msra.mxu0 %v401
    %524 = vmatprep.subr.bf16.mxu0 0
    %525 = vmatpush1.bf16.msra.mxu0 %v402
    %526 = vmatprep.subr.bf16.mxu0 0
    %527 = vmatpush1.bf16.msra.mxu0 %v403
    %528 = vmatprep.subr.bf16.mxu0 0
    %529 = vmatpush1.bf16.msra.mxu0 %v404
    %530 = vmatprep.subr.bf16.mxu0 0
    %531 = vmatpush1.bf16.msra.mxu0 %v405
    %532 = vmatprep.subr.bf16.mxu0 0
    %533 = vmatpush1.bf16.msra.mxu0 %v406
    %534 = vmatprep.subr.bf16.mxu0 0
    %535 = vmatpush1.bf16.msra.mxu0 %v407
    %536 = vmatprep.subr.bf16.mxu0 0
    %537 = vmatpush1.bf16.msra.mxu0 %v408
    %538 = vmatprep.subr.bf16.mxu0 0
    %539 = vmatpush1.bf16.msra.mxu0 %v409
    %540 = vmatprep.subr.bf16.mxu0 0
    %541 = vmatpush1.bf16.msra.mxu0 %v410
    %542 = vmatprep.subr.bf16.mxu0 0
    %543 = vmatpush1.bf16.msra.mxu0 %v411
    %544 = vmatprep.subr.bf16.mxu0 0
    %545 = vmatpush1.bf16.msra.mxu0 %v412
    %546 = vmatprep.subr.bf16.mxu0 0
    %547 = vmatpush1.bf16.msra.mxu0 %v413
    %548 = vmatprep.subr.bf16.mxu0 0
    %549 = vmatpush1.bf16.msra.mxu0 %v414
    %550 = vmatprep.subr.bf16.mxu0 0
    %551 = vmatpush1.bf16.msra.mxu0 %v415
    %552 = vmatprep.mubr.bf16.mxu0 %v185
    %553 = vmatmul.mubr.bf16.gmra.mrb[0].mxu0 %v184
    %v554 = vpop.f32.mrb[0].mxu0
    %v555 = vadd.f32 %v515, %v554
    %v556 = vpop.f32.mrb[0].mxu0
    %v557 = vpop.f32.mrb[0].mxu0
    %v558 = vpop.f32.mrb[0].mxu0
    %559 = vdwg.mxu0
    %560 = vmatprep.subr.bf16.mxu0 0
    %561 = vmatpush1.bf16.msra.mxu0 %v416
    %562 = vmatprep.subr.bf16.mxu0 0
    %563 = vmatpush1.bf16.msra.mxu0 %v417
    %564 = vmatprep.subr.bf16.mxu0 0
    %565 = vmatpush1.bf16.msra.mxu0 %v418
    %566 = vmatprep.subr.bf16.mxu0 0
    %567 = vmatpush1.bf16.msra.mxu0 %v419
    %568 = vmatprep.subr.bf16.mxu0 0
    %569 = vmatpush1.bf16.msra.mxu0 %v420
    %570 = vmatprep.subr.bf16.mxu0 0
    %571 = vmatpush1.bf16.msra.mxu0 %v421
    %572 = vmatprep.subr.bf16.mxu0 0
    %573 = vmatpush1.bf16.msra.mxu0 %v422
    %574 = vmatprep.subr.bf16.mxu0 0
    %575 = vmatpush1.bf16.msra.mxu0 %v423
    %576 = vmatprep.subr.bf16.mxu0 0
    %577 = vmatpush1.bf16.msra.mxu0 %v424
    %578 = vmatprep.subr.bf16.mxu0 0
    %579 = vmatpush1.bf16.msra.mxu0 %v425
    %580 = vmatprep.subr.bf16.mxu0 0
    %581 = vmatpush1.bf16.msra.mxu0 %v426
    %582 = vmatprep.subr.bf16.mxu0 0
    %583 = vmatpush1.bf16.msra.mxu0 %v427
    %584 = vmatprep.subr.bf16.mxu0 0
    %585 = vmatpush1.bf16.msra.mxu0 %v428
    %586 = vmatprep.subr.bf16.mxu0 0
    %587 = vmatpush1.bf16.msra.mxu0 %v429
    %588 = vmatprep.subr.bf16.mxu0 0
    %589 = vmatpush1.bf16.msra.mxu0 %v430
    %590 = vmatprep.subr.bf16.mxu0 0
    %591 = vmatpush1.bf16.msra.mxu0 %v431
    %592 = vmatprep.mubr.bf16.mxu0 %v183
    %593 = vmatmul.mubr.bf16.gmra.mrb[0].mxu0 %v169
    %v594 = vpop.f32.mrb[0].mxu0
    %v595 = vadd.f32 %v555, %v594
    %v596 = vpop.f32.mrb[0].mxu0
    %v597 = vpop.f32.mrb[0].mxu0
    %v598 = vpop.f32.mrb[0].mxu0
    %599 = vdwg.mxu0
    %v600 = vld [vmem:[%s2] sm:$0x1]
    %v601 = vld [vmem:[%s3] sm:$0x1]
    %v602 = vld [vmem:[%s4] sm:$0xf]
    %v603 = vld [vmem:[%s4 + $0x4] sm:$0xf]
    %v604 = vld [vmem:[%s4 + $0x8] sm:$0xf]
    %v605 = vld [vmem:[%s4 + $0xc] sm:$0xf]
    %v606 = vld [vmem:[%s4 + $0x10] sm:$0xf]
    %v607 = vld [vmem:[%s4 + $0x14] sm:$0xf]
    %v608 = vld [vmem:[%s4 + $0x18] sm:$0xf]
    %v609 = vld [vmem:[%s4 + $0x1c] sm:$0xf]
    %vm610 = vcmask 517120
    %v611 = vsel %vm610, %v595, 0.0
    %612 = vadd.xlane.f32.xlu0 %v611
    %v613 = vpop.xlane.xlu0 %612
    %v614 = vrcp.pop 64.0
    %v615 = vmul.f32 %v613, %v614
    %v616 = vsub.f32 %v595, %v615
    %v617 = vmul.f32 %v616, %v616
    %v618 = vsel %vm610, %v617, 0.0
    %619 = vadd.xlane.f32.xlu0 %v618
    %v620 = vpop.xlane.xlu0 %619
    %v621 = vmul.f32 %v620, %v614
    %v622 = vadd.f32 %v621, 1e-05
    %v623 = vrsqrt.pop %v622
    %v624 = vmul.f32 %v616, %v623
    %v626 = vlaneseq
    %v627 = vshrl.u32 %v626, 7
    %v628 = vsub.s32 0, %v627
    %v629 = vrot.slane %v600, %v628
    %v631 = vmul.f32 %v624, %v629
    %v633 = vlaneseq
    %v634 = vshrl.u32 %v633, 7
    %v635 = vsub.s32 0, %v634
    %v636 = vrot.slane %v601, %v635
    %v638 = vadd.f32 %v631, %v636
    %v639 = vpack.c.bf16 %v638, %v638
    %v648 = vunpack.c.l.b16 %v602
    %v649 = vunpack.c.l.b16 %v603
    %v650 = vunpack.c.l.b16 %v604
    %v651 = vunpack.c.l.b16 %v605
    %v652 = vunpack.c.l.b16 %v606
    %v653 = vunpack.c.l.b16 %v607
    %v654 = vunpack.c.l.b16 %v608
    %v655 = vunpack.c.l.b16 %v609
    %v656 = vpack.c.b16 %v649, %v648
    %v657 = vpack.c.b16 %v651, %v650
    %v658 = vpack.c.b16 %v653, %v652
    %v659 = vpack.c.b16 %v655, %v654
    %vm664 = vcmask 523264
    %v666 = vsel %vm664, %v639, 0
    %668 = vmatprep.subr.bf16.mxu0 0
    %669 = vmatpush1.bf16.msra.mxu0 %v656
    %670 = vmatprep.subr.bf16.mxu0 0
    %671 = vmatpush1.bf16.msra.mxu0 %v657
    %672 = vmatprep.subr.bf16.mxu0 0
    %673 = vmatpush1.bf16.msra.mxu0 %v658
    %674 = vmatprep.subr.bf16.mxu0 0
    %675 = vmatpush1.bf16.msra.mxu0 %v659
    %676 = vmatprep.subr.bf16.mxu0 0
    %677 = vmatpush1.bf16.msra.mxu0 0
    %678 = vmatprep.subr.bf16.mxu0 0
    %679 = vmatpush1.bf16.msra.mxu0 0
    %680 = vmatprep.subr.bf16.mxu0 0
    %681 = vmatpush1.bf16.msra.mxu0 0
    %682 = vmatprep.subr.bf16.mxu0 0
    %683 = vmatpush1.bf16.msra.mxu0 0
    %684 = vmatprep.subr.bf16.mxu0 0
    %685 = vmatpush1.bf16.msra.mxu0 0
    %686 = vmatprep.subr.bf16.mxu0 0
    %687 = vmatpush1.bf16.msra.mxu0 0
    %688 = vmatprep.subr.bf16.mxu0 0
    %689 = vmatpush1.bf16.msra.mxu0 0
    %690 = vmatprep.subr.bf16.mxu0 0
    %691 = vmatpush1.bf16.msra.mxu0 0
    %692 = vmatprep.subr.bf16.mxu0 0
    %693 = vmatpush1.bf16.msra.mxu0 0
    %694 = vmatprep.subr.bf16.mxu0 0
    %695 = vmatpush1.bf16.msra.mxu0 0
    %696 = vmatprep.subr.bf16.mxu0 0
    %697 = vmatpush1.bf16.msra.mxu0 0
    %698 = vmatprep.subr.bf16.mxu0 0
    %699 = vmatpush1.bf16.msra.mxu0 0
    %700 = vmatprep.mubr.bf16.mxu0 0
    %701 = vmatmul.mubr.bf16.gmra.mrb[0].mxu0 %v666
    %v702 = vpop.f32.mrb[0].mxu0
    %v703 = vadd.f32 0.0, %v702
    %v704 = vpop.f32.mrb[0].mxu0
    %v705 = vpop.f32.mrb[0].mxu0
    %v706 = vpop.f32.mrb[0].mxu0
    %707 = vdwg.mxu0
    %v708 = vld [vmem:[%s5] sm:$0x1]
    %v709 = vld [vmem:[%s6] sm:$0xf]
    %v710 = vld [vmem:[%s6 + $0x4] sm:$0xf]
    %v711 = vld [vmem:[%s6 + $0x8] sm:$0xf]
    %v712 = vld [vmem:[%s6 + $0xc] sm:$0xf]
    %v713 = vld [vmem:[%s6 + $0x10] sm:$0xf]
    %v714 = vld [vmem:[%s6 + $0x14] sm:$0xf]
    %v715 = vld [vmem:[%s6 + $0x18] sm:$0xf]
    %v716 = vld [vmem:[%s6 + $0x1c] sm:$0xf]
    %v725 = vunpack.c.l.b16 %v709
    %v726 = vunpack.c.l.b16 %v710
    %v727 = vunpack.c.l.b16 %v711
    %v728 = vunpack.c.l.b16 %v712
    %v729 = vunpack.c.l.b16 %v713
    %v730 = vunpack.c.l.b16 %v714
    %v731 = vunpack.c.l.b16 %v715
    %v732 = vunpack.c.l.b16 %v716
    %v733 = vpack.c.b16 %v726, %v725
    %v734 = vpack.c.b16 %v728, %v727
    %v735 = vpack.c.b16 %v730, %v729
    %v736 = vpack.c.b16 %v732, %v731
    %v742 = vsel %vm664, %v708, 0
    %744 = vmatprep.subr.bf16.mxu0 0
    %745 = vmatpush1.bf16.msra.mxu0 %v733
    %746 = vmatprep.subr.bf16.mxu0 0
    %747 = vmatpush1.bf16.msra.mxu0 %v734
    %748 = vmatprep.subr.bf16.mxu0 0
    %749 = vmatpush1.bf16.msra.mxu0 %v735
    %750 = vmatprep.subr.bf16.mxu0 0
    %751 = vmatpush1.bf16.msra.mxu0 %v736
    %752 = vmatprep.subr.bf16.mxu0 0
    %753 = vmatpush1.bf16.msra.mxu0 0
    %754 = vmatprep.subr.bf16.mxu0 0
    %755 = vmatpush1.bf16.msra.mxu0 0
    %756 = vmatprep.subr.bf16.mxu0 0
    %757 = vmatpush1.bf16.msra.mxu0 0
    %758 = vmatprep.subr.bf16.mxu0 0
    %759 = vmatpush1.bf16.msra.mxu0 0
    %760 = vmatprep.subr.bf16.mxu0 0
    %761 = vmatpush1.bf16.msra.mxu0 0
    %762 = vmatprep.subr.bf16.mxu0 0
    %763 = vmatpush1.bf16.msra.mxu0 0
    %764 = vmatprep.subr.bf16.mxu0 0
    %765 = vmatpush1.bf16.msra.mxu0 0
    %766 = vmatprep.subr.bf16.mxu0 0
    %767 = vmatpush1.bf16.msra.mxu0 0
    %768 = vmatprep.subr.bf16.mxu0 0
    %769 = vmatpush1.bf16.msra.mxu0 0
    %770 = vmatprep.subr.bf16.mxu0 0
    %771 = vmatpush1.bf16.msra.mxu0 0
    %772 = vmatprep.subr.bf16.mxu0 0
    %773 = vmatpush1.bf16.msra.mxu0 0
    %774 = vmatprep.subr.bf16.mxu0 0
    %775 = vmatpush1.bf16.msra.mxu0 0
    %776 = vmatprep.mubr.bf16.mxu0 0
    %777 = vmatmul.mubr.bf16.gmra.mrb[0].mxu0 %v742
    %v778 = vpop.f32.mrb[0].mxu0
    %v779 = vadd.f32 0.0, %v778
    %v780 = vpop.f32.mrb[0].mxu0
    %v781 = vpop.f32.mrb[0].mxu0
    %v782 = vpop.f32.mrb[0].mxu0
    %783 = vdwg.mxu0
    %v784 = vld [vmem:[%s7] sm:$0x1]
    %v785 = vld [vmem:[%s8] sm:$0x1]
    %v786 = vld [vmem:[%s9] sm:$0xf]
    %v787 = vld [vmem:[%s9 + $0x4] sm:$0xf]
    %v788 = vld [vmem:[%s9 + $0x8] sm:$0xf]
    %v789 = vld [vmem:[%s9 + $0xc] sm:$0xf]
    %v790 = vld [vmem:[%s9 + $0x10] sm:$0xf]
    %v791 = vld [vmem:[%s9 + $0x14] sm:$0xf]
    %v792 = vld [vmem:[%s9 + $0x18] sm:$0xf]
    %v793 = vld [vmem:[%s9 + $0x1c] sm:$0xf]
    %v794 = vsel %vm610, %v779, 0.0
    %795 = vadd.xlane.f32.xlu0 %v794
    %v796 = vpop.xlane.xlu0 %795
    %v797 = vmul.f32 %v796, %v614
    %v798 = vsub.f32 %v779, %v797
    %v799 = vmul.f32 %v798, %v798
    %v800 = vsel %vm610, %v799, 0.0
    %801 = vadd.xlane.f32.xlu0 %v800
    %v802 = vpop.xlane.xlu0 %801
    %v803 = vmul.f32 %v802, %v614
    %v804 = vadd.f32 %v803, 1e-05
    %v805 = vrsqrt.pop %v804
    %v806 = vmul.f32 %v798, %v805
    %v808 = vlaneseq
    %v809 = vshrl.u32 %v808, 7
    %v810 = vsub.s32 0, %v809
    %v811 = vrot.slane %v784, %v810
    %v813 = vmul.f32 %v806, %v811
    %v815 = vlaneseq
    %v816 = vshrl.u32 %v815, 7
    %v817 = vsub.s32 0, %v816
    %v818 = vrot.slane %v785, %v817
    %v820 = vadd.f32 %v813, %v818
    %v821 = vpack.c.bf16 %v820, %v820
    %v830 = vunpack.c.l.b16 %v786
    %v831 = vunpack.c.l.b16 %v787
    %v832 = vunpack.c.l.b16 %v788
    %v833 = vunpack.c.l.b16 %v789
    %v834 = vunpack.c.l.b16 %v790
    %v835 = vunpack.c.l.b16 %v791
    %v836 = vunpack.c.l.b16 %v792
    %v837 = vunpack.c.l.b16 %v793
    %v838 = vpack.c.b16 %v831, %v830
    %v839 = vpack.c.b16 %v833, %v832
    %v840 = vpack.c.b16 %v835, %v834
    %v841 = vpack.c.b16 %v837, %v836
    %v847 = vsel %vm664, %v821, 0
    %849 = vmatprep.subr.bf16.mxu0 0
    %850 = vmatpush1.bf16.msra.mxu0 %v838
    %851 = vmatprep.subr.bf16.mxu0 0
    %852 = vmatpush1.bf16.msra.mxu0 %v839
    %853 = vmatprep.subr.bf16.mxu0 0
    %854 = vmatpush1.bf16.msra.mxu0 %v840
    %855 = vmatprep.subr.bf16.mxu0 0
    %856 = vmatpush1.bf16.msra.mxu0 %v841
    %857 = vmatprep.subr.bf16.mxu0 0
    %858 = vmatpush1.bf16.msra.mxu0 0
    %859 = vmatprep.subr.bf16.mxu0 0
    %860 = vmatpush1.bf16.msra.mxu0 0
    %861 = vmatprep.subr.bf16.mxu0 0
    %862 = vmatpush1.bf16.msra.mxu0 0
    %863 = vmatprep.subr.bf16.mxu0 0
    %864 = vmatpush1.bf16.msra.mxu0 0
    %865 = vmatprep.subr.bf16.mxu0 0
    %866 = vmatpush1.bf16.msra.mxu0 0
    %867 = vmatprep.subr.bf16.mxu0 0
    %868 = vmatpush1.bf16.msra.mxu0 0
    %869 = vmatprep.subr.bf16.mxu0 0
    %870 = vmatpush1.bf16.msra.mxu0 0
    %871 = vmatprep.subr.bf16.mxu0 0
    %872 = vmatpush1.bf16.msra.mxu0 0
    %873 = vmatprep.subr.bf16.mxu0 0
    %874 = vmatpush1.bf16.msra.mxu0 0
    %875 = vmatprep.subr.bf16.mxu0 0
    %876 = vmatpush1.bf16.msra.mxu0 0
    %877 = vmatprep.subr.bf16.mxu0 0
    %878 = vmatpush1.bf16.msra.mxu0 0
    %879 = vmatprep.subr.bf16.mxu0 0
    %880 = vmatpush1.bf16.msra.mxu0 0
    %881 = vmatprep.mubr.bf16.mxu0 0
    %882 = vmatmul.mubr.bf16.gmra.mrb[0].mxu0 %v847
    %v883 = vpop.f32.mrb[0].mxu0
    %v884 = vadd.f32 0.0, %v883
    %v885 = vpop.f32.mrb[0].mxu0
    %v886 = vpop.f32.mrb[0].mxu0
    %v887 = vpop.f32.mrb[0].mxu0
    %888 = vdwg.mxu0
    %v889 = vmul.f32 %v703, %v703
    %v890 = vsel %vm610, %v889, 0.0
    %891 = vadd.xlane.f32.xlu0 %v890
    %v892 = vpop.xlane.xlu0 %891
    %v893 = vadd.f32 %v892, 1e-12
    %v894 = vrsqrt.pop %v893
    %v895 = vmul.f32 %v703, %v894
    %v896 = vmul.f32 %v884, %v884
    %v897 = vsel %vm610, %v896, 0.0
    %898 = vadd.xlane.f32.xlu0 %v897
    %v899 = vpop.xlane.xlu0 %898
    %v900 = vadd.f32 %v899, 1e-12
    %v901 = vrsqrt.pop %v900
    %v902 = vmul.f32 %v884, %v901
    %v904 = vsel %vm664, %v895, 0
    %v907 = vsel %vm664, %v902, 0
    %909 = vmatprep.subr.mxu0 0.0
    %910 = vmatpush1.xpose.msra.mxu0 %v907
    %911 = vmatprep.subr.mxu0 0.0
    %912 = vmatpush1.xpose.msra.mxu0 0.0
    %913 = vmatprep.subr.mxu0 0.0
    %914 = vmatpush1.xpose.msra.mxu0 0.0
    %915 = vmatprep.subr.mxu0 0.0
    %916 = vmatpush1.xpose.msra.mxu0 0.0
    %917 = vmatprep.subr.mxu0 0.0
    %918 = vmatpush1.xpose.msra.mxu0 0.0
    %919 = vmatprep.subr.mxu0 0.0
    %920 = vmatpush1.xpose.msra.mxu0 0.0
    %921 = vmatprep.subr.mxu0 0.0
    %922 = vmatpush1.xpose.msra.mxu0 0.0
    %923 = vmatprep.subr.mxu0 0.0
    %924 = vmatpush1.xpose.msra.mxu0 0.0
    %925 = vmatprep.subr.mxu0 0.0
    %926 = vmatpush1.xpose.msra.mxu0 0.0
    %927 = vmatprep.subr.mxu0 0.0
    %928 = vmatpush1.xpose.msra.mxu0 0.0
    %929 = vmatprep.subr.mxu0 0.0
    %930 = vmatpush1.xpose.msra.mxu0 0.0
    %931 = vmatprep.subr.mxu0 0.0
    %932 = vmatpush1.xpose.msra.mxu0 0.0
    %933 = vmatprep.subr.mxu0 0.0
    %934 = vmatpush1.xpose.msra.mxu0 0.0
    %935 = vmatprep.subr.mxu0 0.0
    %936 = vmatpush1.xpose.msra.mxu0 0.0
    %937 = vmatprep.subr.mxu0 0.0
    %938 = vmatpush1.xpose.msra.mxu0 0.0
    %939 = vmatprep.subr.mxu0 0.0
    %940 = vmatpush1.xpose.msra.mxu0 0.0
    %941 = vmatprep.subr.mxu0 0.0
    %942 = vmatpush1.xpose.msra.mxu0 0.0
    %943 = vmatprep.subr.mxu0 0.0
    %944 = vmatpush1.xpose.msra.mxu0 0.0
    %945 = vmatprep.subr.mxu0 0.0
    %946 = vmatpush1.xpose.msra.mxu0 0.0
    %947 = vmatprep.subr.mxu0 0.0
    %948 = vmatpush1.xpose.msra.mxu0 0.0
    %949 = vmatprep.subr.mxu0 0.0
    %950 = vmatpush1.xpose.msra.mxu0 0.0
    %951 = vmatprep.subr.mxu0 0.0
    %952 = vmatpush1.xpose.msra.mxu0 0.0
    %953 = vmatprep.subr.mxu0 0.0
    %954 = vmatpush1.xpose.msra.mxu0 0.0
    %955 = vmatprep.subr.mxu0 0.0
    %956 = vmatpush1.xpose.msra.mxu0 0.0
    %957 = vmatprep.subr.mxu0 0.0
    %958 = vmatpush1.xpose.msra.mxu0 0.0
    %959 = vmatprep.subr.mxu0 0.0
    %960 = vmatpush1.xpose.msra.mxu0 0.0
    %961 = vmatprep.subr.mxu0 0.0
    %962 = vmatpush1.xpose.msra.mxu0 0.0
    %963 = vmatprep.subr.mxu0 0.0
    %964 = vmatpush1.xpose.msra.mxu0 0.0
    %965 = vmatprep.subr.mxu0 0.0
    %966 = vmatpush1.xpose.msra.mxu0 0.0
    %967 = vmatprep.subr.mxu0 0.0
    %968 = vmatpush1.xpose.msra.mxu0 0.0
    %969 = vmatprep.subr.mxu0 0.0
    %970 = vmatpush1.xpose.msra.mxu0 0.0
    %971 = vmatprep.subr.mxu0 0.0
    %972 = vmatpush1.xpose.msra.mxu0 0.0
    %973 = vmatprep.mubr.f32.mxu0 0.0
    %974 = vmatmul.mubr.f32.gmra.mrb[0].mxu0 %v904
    %v975 = vpop.f32.mrb[0].mxu0
    %v976 = vadd.f32 0.0, %v975
    %v977 = vpop.f32.mrb[0].mxu0
    %978 = vdwg.mxu0
    %s979 = sld [smem:[#allocation2]]
    %v980 = vstv %s979
    %v981 = vmul.f32 %v976, %v980
    %v982 = vsub.f32 1.0, %v981
    %vm983 = vcmask 9216
    %984 = vst.msk [vmem:[#allocation3] sm:$0x3] %vm983, %v982
    // Predicated region
    $region46: #{clip_loss_forward.1} parent=1 // pred_check
      _
    $region47: #{clip_loss_forward.1} parent=1 // pred_check_branch
      %986 = sbr.rel (0) target = $region49
    $region48: #{clip_loss_forward.1} parent=1 // pred_region
      %s988 = ssub.s32 32, 32
      %989 = vsyncadd [#allocation4], %s988
      %s991 = sshll.u32 [#allocation3], 4
      %s992 = int_to_ptr.vmem [resolvable:$true] %s991
      %994 = dma.vmem_to_hbm [thread:$0]  %s992, 32, %s11, [#allocation4]
    $region49: #{clip_loss_forward.1} parent=1 // pred_fallthru
      _
    // Predicated region
    $region50: #{clip_loss_forward.1} parent=1 // pred_check
      _
    $region51: #{clip_loss_forward.1} parent=1 // pred_check_branch
      %996 = sbr.rel (0) target = $region53
    $region52: #{clip_loss_forward.1} parent=1 // pred_region
      %997 = dma.done [#allocation4], 32
    $region53: #{clip_loss_forward.1} parent=1 // pred_fallthru
      _
    %998 = vsyncpa [#allocation4], 1

</llo_original>
